<compile_context>
chip_gen: v7x
topology: tpu7x:2x2x1
jax: 0.10.0
libtpu: 0.0.40
codegen_flags: <defaults>
</compile_context>

<pallas_src>
import functools

import jax
import jax.numpy as jnp
from jax import lax
from jax.experimental import pallas as pl
from jax.experimental.pallas import tpu as pltpu


def _round_up(x: int, m: int) -> int:
    return (x + m - 1) // m * m


# Conservative "keep the table resident in VMEM" threshold, sized for v7x
# (64 MiB physical / 32 MiB scoped default VMEM) with double-buffer headroom.
_VMEM_RESIDENT_TABLE_LIMIT = 16 * 1024 * 1024


# ---------------------------------------------------------------------------
# Path A: table resident in VMEM, one-hot MXU gather, T tokens per grid step.
# ---------------------------------------------------------------------------
def _resident_gather_kernel(ids_ref, table_ref, out_ref):
    # ids_ref  : (T, 1) int32 block of (clamped) token ids
    # table_ref: (vocab, width) full table -- same block every step, so it is
    #            DMA'd from HBM once and stays resident in VMEM
    # out_ref  : (T, width) output block
    ids = ids_ref[...]                                   # (T, 1)
    t_blk = ids.shape[0]
    vocab = table_ref.shape[0]
    col = lax.broadcasted_iota(jnp.int32, (t_blk, vocab), 1)
    one_hot = (ids == col).astype(table_ref.dtype)       # (T, vocab)
    out_ref[...] = jnp.dot(
        one_hot, table_ref[...],
        preferred_element_type=jnp.float32).astype(out_ref.dtype)


def _resident_lookup(ids_flat, table, block_tokens, vmem_limit_bytes):
    n = ids_flat.shape[0]
    vocab, width = table.shape
    t = block_tokens
    n_pad = _round_up(max(n, 1), t)
    ids2d = jnp.pad(ids_flat, (0, n_pad - n)).reshape(n_pad, 1)

    out = pl.pallas_call(
        _resident_gather_kernel,
        out_shape=jax.ShapeDtypeStruct((n_pad, width), table.dtype),
        grid=(n_pad // t,),
        in_specs=[
            pl.BlockSpec((t, 1), lambda i: (i, 0)),
            pl.BlockSpec((vocab, width), lambda i: (0, 0)),   # resident table
        ],
        out_specs=pl.BlockSpec((t, width), lambda i: (i, 0)),
        compiler_params=pltpu.CompilerParams(
            dimension_semantics=("parallel",),
            vmem_limit_bytes=vmem_limit_bytes),
    )(ids2d, table)
    return out[:n]


# ---------------------------------------------------------------------------
# Path B: table stays in HBM; manual batched DMA gather with K copies in
# flight (for tables too large to keep resident in VMEM).
# ---------------------------------------------------------------------------
def _hbm_gather_kernel(ids_smem, table_hbm, out_ref, sem, *,
                       block_tokens, n_slots):
    # ids_smem : (n_pad,) int32 ids, scalar-prefetched into SMEM
    # table_hbm: (vocab, width) raw HBM ref (memory_space=pl.ANY)
    # out_ref  : (T, width) VMEM output block (filled via manual DMAs)
    # sem      : DMA semaphore ring, shape (n_slots,)
    t_blk = block_tokens
    k = n_slots
    base = pl.program_id(0) * t_blk

    def start(tok):
        row = ids_smem[base + tok]
        pltpu.make_async_copy(
            table_hbm.at[pl.ds(row, 1), :],
            out_ref.at[pl.ds(tok, 1), :],
            sem.at[tok % k]).start()

    def wait(tok):
        # Only the transfer size and the semaphore matter for the wait; the
        # source row index is a placeholder.
        pltpu.make_async_copy(
            table_hbm.at[pl.ds(0, 1), :],
            out_ref.at[pl.ds(tok, 1), :],
            sem.at[tok % k]).wait()

    # Prime: put K row-copies in flight.
    for tok in range(k):
        start(tok)

    # Steady state: retire the copy owning this slot, then reissue.
    def body(tok, carry):
        wait(tok - k)
        start(tok)
        return carry

    lax.fori_loop(k, t_blk, body, 0, unroll=True)

    # Drain the last K outstanding copies before the block is written back.
    for tok in range(t_blk - k, t_blk):
        wait(tok)


def _hbm_lookup(ids_flat, table, block_tokens, n_slots, vmem_limit_bytes):
    n = ids_flat.shape[0]
    _, width = table.shape
    t = block_tokens
    n_pad = _round_up(max(n, 1), t)
    ids_pad = jnp.pad(ids_flat, (0, n_pad - n))
    k = min(n_slots, t)

    kernel = functools.partial(
        _hbm_gather_kernel, block_tokens=t, n_slots=k)

    out = pl.pallas_call(
        kernel,
        out_shape=jax.ShapeDtypeStruct((n_pad, width), table.dtype),
        grid_spec=pltpu.PrefetchScalarGridSpec(
            num_scalar_prefetch=1,                 # ids -> SMEM
            grid=(n_pad // t,),
            in_specs=[pl.BlockSpec(memory_space=pl.ANY)],   # table stays in HBM
            out_specs=pl.BlockSpec((t, width), lambda i, ids: (i, 0)),
            scratch_shapes=[pltpu.SemaphoreType.DMA((k,))],
        ),
        compiler_params=pltpu.CompilerParams(
            dimension_semantics=("parallel",),
            vmem_limit_bytes=vmem_limit_bytes),
    )(ids_pad, table)
    return out[:n]


# ---------------------------------------------------------------------------
# Public wrapper: equivalent of nn.Embedding(vocab_size, width)(input_ids).
# ---------------------------------------------------------------------------
def embedding_lookup(input_ids: jax.Array, table: jax.Array, *,
                     block_tokens: int = 256,
                     force_hbm_gather: bool = False) -> jax.Array:
    orig_shape = input_ids.shape
    vocab, width = table.shape

    ids_flat = input_ids.reshape(-1).astype(jnp.int32)
    # torch.nn.Embedding raises on out-of-range ids; we clamp (matches
    # jnp.take's default) so the gather never reads past the table.
    ids_flat = jnp.clip(ids_flat, 0, vocab - 1)
    n = ids_flat.shape[0]

    # Tokens per grid step: sublane-dense (multiple of 8), no larger than the
    # padded token count for tiny inputs.
    t = max(8, min(_round_up(block_tokens, 8), _round_up(max(n, 1), 8)))

    itemsize = jnp.dtype(table.dtype).itemsize
    table_bytes = vocab * width * itemsize
    out_block_bytes = t * width * itemsize
    lane = 128

    use_resident = (not force_hbm_gather) and (
        table_bytes <= _VMEM_RESIDENT_TABLE_LIMIT)

    if use_resident:
        ids_block_bytes = t * lane * 4                    # (t,1) int32, lane-padded
        one_hot_bytes = t * _round_up(vocab, lane) * 4
        need = (table_bytes + 2 * (out_block_bytes + ids_block_bytes)
                + one_hot_bytes + (4 << 20))
        vmem_limit = int(min(max(need, 8 << 20), 32 << 20))
        out = _resident_lookup(ids_flat, table, t, vmem_limit)
    else:
        need = 2 * out_block_bytes + (4 << 20)
        vmem_limit = int(min(max(need, 8 << 20), 32 << 20))
        out = _hbm_lookup(ids_flat, table, t, 16, vmem_limit)

    return out.reshape(orig_shape + (width,))


if __name__ == "__main__":
    # Small, deterministic synthetic setup (no vocab / embedding files).
    # TODO(synk): load_vocab / embedding_file parsing are host-side file I/O
    # (weight construction), not part of the forward pass; not translated.
    vocab_size = 16
    width = 128          # lane-dense embedding width
    batch, seq = 2, 8

    key = jax.random.PRNGKey(0)
    k_table, k_ids = jax.random.split(key)

    # nn.Embedding default init: weight ~ N(0, 1), float32.
    table = jax.random.normal(k_table, (vocab_size, width), dtype=jnp.float32)
    input_ids = jax.random.randint(
        k_ids, (batch, seq), 0, vocab_size, dtype=jnp.int32)

    ref = jnp.take(table, input_ids, axis=0)

    # Fast path: VMEM-resident table + one-hot MXU gather.
    out_fast = jax.block_until_ready(embedding_lookup(input_ids, table))
    assert out_fast.shape == (batch, seq, width), out_fast.shape
    assert out_fast.dtype == jnp.float32
    assert jnp.allclose(out_fast, ref), "resident-table path mismatch"

    # Large-table path: batched manual DMA gather from HBM (forced here so
    # both code paths are exercised on the small demo).
    out_hbm = jax.block_until_ready(
        embedding_lookup(input_ids, table, force_hbm_gather=True))
    assert out_hbm.shape == (batch, seq, width), out_hbm.shape
    assert jnp.allclose(out_hbm, ref), "HBM DMA-gather path mismatch"

    print("KERNEL_OK")
</pallas_src>

<mosaic_0001>
module attributes {stable_mosaic.version = 11 : i64} {
  func.func @_resident_gather_kernel(%arg0: i32, %arg1: memref<16x1xi32, #tpu.memory_space<vmem>>, %arg2: memref<16x128xf32, #tpu.memory_space<vmem>>, %arg3: memref<16x128xf32, #tpu.memory_space<vmem>>) attributes {dimension_semantics = [#tpu.dimension_semantics<parallel>], iteration_bounds = array<i64: 1>, scalar_prefetch = 0 : i64, scratch_operands = 0 : i64, tpu.core_type = #tpu.core_type<tc>, window_params = [{transform_indices = @transform_0, window_bounds = array<i64: 16, 1>}, {pipeline_mode = #tpu.pipeline_mode<synchronous>, transform_indices = @transform_1, window_bounds = array<i64: 16, 128>}, {transform_indices = @transform_2, window_bounds = array<i64: 16, 128>}]} {
    %c0 = arith.constant 0 : index
    %c0_0 = arith.constant 0 : index
    %0 = vector.load %arg1[%c0, %c0_0] : memref<16x1xi32, #tpu.memory_space<vmem>>, vector<16x1xi32>
    %1 = tpu.iota {dimensions = array<i32: 1>} : vector<16x16xi32>
    %2 = vector.broadcast %0 : vector<16x1xi32> to vector<16x16xi32>
    %3 = arith.cmpi eq, %2, %1 : vector<16x16xi32>
    %4 = arith.extui %3 : vector<16x16xi1> to vector<16x16xi32>
    %5 = arith.sitofp %4 : vector<16x16xi32> to vector<16x16xf32>
    %c0_1 = arith.constant 0 : index
    %c0_2 = arith.constant 0 : index
    %6 = vector.load %arg2[%c0_1, %c0_2] : memref<16x128xf32, #tpu.memory_space<vmem>>, vector<16x128xf32>
    %cst = arith.constant dense<0.000000e+00> : vector<16x128xf32>
    %7 = tpu.matmul %5, %6, %cst {dimension_numbers = #tpu.dot_dimension_numbers<[1], [0], [0], [1], [0, 0, 1, 1], [], []>} : vector<16x16xf32>, vector<16x128xf32>, vector<16x128xf32> -> vector<16x128xf32>
    %c0_3 = arith.constant 0 : index
    %c0_4 = arith.constant 0 : index
    %8 = vector.load %arg3[%c0_3, %c0_4] : memref<16x128xf32, #tpu.memory_space<vmem>>, vector<16x128xf32>
    tpu.vector_store %arg3[%c0_3, %c0_4], %7 {strides = array<i32>} : memref<16x128xf32, #tpu.memory_space<vmem>>, vector<16x128xf32>,
    return
  }
  func.func @transform_0(%arg0: i32) -> (i32, i32) {
    %c0_i32 = arith.constant 0 : i32
    %c0_i32_0 = arith.constant 0 : i32
    return %arg0, %c0_i32 : i32, i32
  }
  func.func @transform_1(%arg0: i32) -> (i32, i32) {
    %c0_i32 = arith.constant 0 : i32
    %c0_i32_0 = arith.constant 0 : i32
    %c0_i32_1 = arith.constant 0 : i32
    return %c0_i32, %c0_i32_0 : i32, i32
  }
  func.func @transform_2(%arg0: i32) -> (i32, i32) {
    %c0_i32 = arith.constant 0 : i32
    %c0_i32_0 = arith.constant 0 : i32
    return %arg0, %c0_i32 : i32, i32
  }
}

</mosaic_0001>

<llo_original>
// kernel: tpu_custom_call.1
$region0: #{tpu_custom_call.1}
  #allocation0 [shape = 'u32[]', space=smem, size = 0x4, offset = 0x4, fixed_abs, tag = 'smem constant byte address 0x4 - core index']
  #allocation1 [shape = 'u32[144,128]{1,0:T(1,128)}', space=vmem, size = 0x12000, scoped, tag = 'internal scratch']
  %s0 = inlined_call_operand.vmem [shape: s32[16,1], index: 0, kind: input, shape index: {}]
  %s1 = inlined_call_operand.vmem [shape: f32[16,128], index: 1, kind: input, shape index: {}]
  %s2 = inlined_call_operand.hbm [shape: f32[16,128], index: 2, kind: output, shape index: {}]
  %s3 = sld [smem:[#allocation0]]
  $region18: #{tpu_custom_call.1} parent=0
    _
  %s5 = ssub.s32 1, %s3
  %s6 = scalar_select 0, %s5, %s3
  $region1: #{tpu_custom_call.1} parent=0
    #allocation2 [shape = 'u8[8192]{0}', space=vmem, size = 0x2000, scoped, tag = 'output window, operand 0, single buffered']
    #allocation3 [shape = 's32[1]{0}', space=sflag, size = 0x4, scoped, tag = 'scoped memory for tpu_custom_call.1']
    %7 = vsyncpa [#allocation3], 0
    // Predicated region
    $region2: #{tpu_custom_call.1} parent=1 // pred_check
      _
    $region3: #{tpu_custom_call.1} parent=1 // pred_check_branch
      %9 = sbr.rel (0) target = $region5
    $region4: #{tpu_custom_call.1} parent=1 // pred_region
      _
    $region5: #{tpu_custom_call.1} parent=1 // pred_fallthru
      _
    // Predicated region
    $region6: #{tpu_custom_call.1} parent=1 // pred_check
      _
    $region7: #{tpu_custom_call.1} parent=1 // pred_check_branch
      %11 = sbr.rel (0) target = $region9
    $region8: #{tpu_custom_call.1} parent=1 // pred_region
      _
    $region9: #{tpu_custom_call.1} parent=1 // pred_fallthru
      _
    %v12 = vld [vmem:[%s0] sm:$0xff]
    %v13 = vld [vmem:[%s0 + $0x8] sm:$0xff]
    %v14 = vlaneseq
    %v15 = vand.u32 %v14, 127
    %16 = vset.pattern.permute.xlu0 0
    %17 = vperm.xlu0 %16, %v12
    %v18 = vpop.permute.xlu0 %17
    %19 = vset.pattern.permute.xlu0 0
    %20 = vperm.xlu0 %19, %v13
    %v21 = vpop.permute.xlu0 %20
    %vm22 = vcmp.eq.s32.totalorder %v18, %v15
    %vm23 = vcmp.eq.s32.totalorder %v21, %v15
    %v24 = vsel %vm22, 1, 0
    %v25 = vsel %vm23, 1, 0
    %v26 = vcvt.s32.f32 %v24
    %v27 = vcvt.s32.f32 %v25
    %v28 = vld [vmem:[%s1] sm:$0xff]
    %v29 = vld [vmem:[%s1 + $0x8] sm:$0xff]
    %vm30 = vcmask 130048
    %v32 = vsel %vm30, %v26, 0
    %v35 = vsel %vm30, %v27, 0
    %37 = vmatprep.subr.mxu0 0.0
    %38 = vmatpush1.msra.mxu0 %v28
    %39 = vmatprep.subr.mxu0 0.0
    %40 = vmatpush1.msra.mxu0 %v29
    %41 = vmatprep.subr.mxu0 0.0
    %42 = vmatpush1.msra.mxu0 0.0
    %43 = vmatprep.subr.mxu0 0.0
    %44 = vmatpush1.msra.mxu0 0.0
    %45 = vmatprep.subr.mxu0 0.0
    %46 = vmatpush1.msra.mxu0 0.0
    %47 = vmatprep.subr.mxu0 0.0
    %48 = vmatpush1.msra.mxu0 0.0
    %49 = vmatprep.subr.mxu0 0.0
    %50 = vmatpush1.msra.mxu0 0.0
    %51 = vmatprep.subr.mxu0 0.0
    %52 = vmatpush1.msra.mxu0 0.0
    %53 = vmatprep.subr.mxu0 0.0
    %54 = vmatpush1.msra.mxu0 0.0
    %55 = vmatprep.subr.mxu0 0.0
    %56 = vmatpush1.msra.mxu0 0.0
    %57 = vmatprep.subr.mxu0 0.0
    %58 = vmatpush1.msra.mxu0 0.0
    %59 = vmatprep.subr.mxu0 0.0
    %60 = vmatpush1.msra.mxu0 0.0
    %61 = vmatprep.subr.mxu0 0.0
    %62 = vmatpush1.msra.mxu0 0.0
    %63 = vmatprep.subr.mxu0 0.0
    %64 = vmatpush1.msra.mxu0 0.0
    %65 = vmatprep.subr.mxu0 0.0
    %66 = vmatpush1.msra.mxu0 0.0
    %67 = vmatprep.subr.mxu0 0.0
    %68 = vmatpush1.msra.mxu0 0.0
    %69 = vmatprep.subr.mxu0 0.0
    %70 = vmatpush1.msra.mxu0 0.0
    %71 = vmatprep.subr.mxu0 0.0
    %72 = vmatpush1.msra.mxu0 0.0
    %73 = vmatprep.subr.mxu0 0.0
    %74 = vmatpush1.msra.mxu0 0.0
    %75 = vmatprep.subr.mxu0 0.0
    %76 = vmatpush1.msra.mxu0 0.0
    %77 = vmatprep.subr.mxu0 0.0
    %78 = vmatpush1.msra.mxu0 0.0
    %79 = vmatprep.subr.mxu0 0.0
    %80 = vmatpush1.msra.mxu0 0.0
    %81 = vmatprep.subr.mxu0 0.0
    %82 = vmatpush1.msra.mxu0 0.0
    %83 = vmatprep.subr.mxu0 0.0
    %84 = vmatpush1.msra.mxu0 0.0
    %85 = vmatprep.subr.mxu0 0.0
    %86 = vmatpush1.msra.mxu0 0.0
    %87 = vmatprep.subr.mxu0 0.0
    %88 = vmatpush1.msra.mxu0 0.0
    %89 = vmatprep.subr.mxu0 0.0
    %90 = vmatpush1.msra.mxu0 0.0
    %91 = vmatprep.subr.mxu0 0.0
    %92 = vmatpush1.msra.mxu0 0.0
    %93 = vmatprep.subr.mxu0 0.0
    %94 = vmatpush1.msra.mxu0 0.0
    %95 = vmatprep.subr.mxu0 0.0
    %96 = vmatpush1.msra.mxu0 0.0
    %97 = vmatprep.subr.mxu0 0.0
    %98 = vmatpush1.msra.mxu0 0.0
    %99 = vmatprep.subr.mxu0 0.0
    %100 = vmatpush1.msra.mxu0 0.0
    %101 = vmatprep.mubr.f32.mxu0 0.0
    %102 = vmatmul.mubr.f32.gmra.mrb[0].mxu0 %v32
    %v103 = vpop.f32.mrb[0].mxu0
    %v104 = vadd.f32 0.0, %v103
    %v105 = vpop.f32.mrb[0].mxu0
    %106 = vmatprep.mubr.f32.mxu0 0.0
    %107 = vmatmul.mubr.f32.gmra.mrb[0].mxu0 %v35
    %v108 = vpop.f32.mrb[0].mxu0
    %v109 = vadd.f32 0.0, %v108
    %v110 = vpop.f32.mrb[0].mxu0
    %111 = vdwg.mxu0
    %112 = vst [vmem:[#allocation2] sm:$0xff] %v104
    %113 = vst [vmem:[#allocation2 + $0x8] sm:$0xff] %v109
    // Predicated region
    $region10: #{tpu_custom_call.1} parent=1 // pred_check
      _
    $region11: #{tpu_custom_call.1} parent=1 // pred_check_branch
      %115 = sbr.rel (0) target = $region13
    $region12: #{tpu_custom_call.1} parent=1 // pred_region
      %s117 = ssub.s32 256, 256
      %118 = vsyncadd [#allocation3], %s117
      %s119 = sshll.u32 [#allocation2], 4
      %s120 = int_to_ptr.vmem [resolvable:$true] %s119
      %125 = dma.vmem_to_hbm [thread:$0]  %s120, 256, %s2, [#allocation3], 128, 128, 8
    $region13: #{tpu_custom_call.1} parent=1 // pred_fallthru
      _
    // Predicated region
    $region14: #{tpu_custom_call.1} parent=1 // pred_check
      _
    $region15: #{tpu_custom_call.1} parent=1 // pred_check_branch
      %127 = sbr.rel (0) target = $region17
    $region16: #{tpu_custom_call.1} parent=1 // pred_region
      %128 = dma.done [#allocation3], 256
    $region17: #{tpu_custom_call.1} parent=1 // pred_fallthru
      _
    %129 = vsyncpa [#allocation3], 1

</llo_original>
